<compile_context>
chip_gen: v5e
topology: v5e:2x2
jax: 0.10.0
libtpu: 0.0.40
codegen_flags: <defaults>
</compile_context>

<pallas_src>
import jax
import jax.numpy as jnp
from jax.experimental import pallas as pl
from jax.experimental.pallas import tpu as pltpu


def _make_kernel(n_total, block_n, inner_steps):
    """Tiled streaming-reduction kernel; all sizes are compile-time constants."""

    def kernel(logits_ref, patch_ref, mask_ref, tgt_ref, partials_ref,
               acc_ce, acc_dice, acc_cls):
        o = pl.program_id(0)          # outer batch chunk ("parallel" -> TC split on v7x)
        i = pl.program_id(1)          # inner reduction step ("arbitrary")

        @pl.when(i == 0)
        def _init():
            acc_ce[...] = jnp.zeros_like(acc_ce)
            acc_dice[...] = jnp.zeros_like(acc_dice)
            acc_cls[...] = jnp.zeros_like(acc_cls)

        bn, c = logits_ref.shape

        # Logical tile index. Tiles past the real extent ("phantom" tiles from
        # the even 2-way outer split) are clamped in the index_map and fully
        # masked out here; padded rows of the ragged last tile likewise.
        t_idx = o * inner_steps + i
        row = jax.lax.broadcasted_iota(jnp.int32, (bn, 1), 0) + t_idx * block_n
        valid = row < n_total                                     # [bn, 1] bool

        # -------- CrossEntropyLoss(predict_img, targets) per row ------------
        logits = logits_ref[...].astype(jnp.float32)              # [bn, C]
        tgt = tgt_ref[...]                                        # [bn, 1] i32
        m = jnp.max(logits, axis=-1, keepdims=True)
        lse = m + jnp.log(jnp.sum(jnp.exp(logits - m), axis=-1, keepdims=True))
        col = jax.lax.broadcasted_iota(jnp.int32, (bn, c), 1)
        picked = jnp.sum(jnp.where(col == tgt, logits, 0.0), axis=-1,
                         keepdims=True)
        # where-selects (NOT arithmetic masking): garbage in padded/phantom
        # rows cannot leak NaN/inf through a select.
        ce_per = jnp.where(valid, lse - picked, 0.0)               # [bn, 1]

        # -------- Dice_loss(predict_patch, mask, targets) per row -----------
        # Elementwise math in the native (possibly bf16) dtype: packed VALU on
        # v6e/v7x cuts per-element VPU work and halves the live temporaries;
        # reductions accumulate in f32. (On v5e Mosaic widens the bf16 ops,
        # which is hidden under DMA — the kernel is HBM-bound there.)
        p = patch_ref[...]                                        # [bn, F]
        t = mask_ref[...]                                         # [bn, F]
        top = jnp.sum((p * t).astype(jnp.float32), axis=-1,
                      keepdims=True) + 1e-10
        down = jnp.sum((p + t).astype(jnp.float32), axis=-1,
                       keepdims=True) + 1e-10
        dice = 2.0 * top * pl.reciprocal(down, approx=True)        # EUP slot
        cls = jnp.where(valid, tgt.astype(jnp.float32), 0.0)       # class_y
        dice_per = jnp.where(valid, cls * (1.0 - dice), 0.0)       # [bn, 1]

        # -------- accumulate per-row partials in VMEM (plain VPU adds) ------
        # No per-step cross-lane reduce or SMEM scalar hop; the single reduce
        # to scalars happens once per outer chunk below.
        acc_ce[...] += ce_per
        acc_dice[...] += dice_per
        acc_cls[...] += cls

        # -------- per-outer-chunk finalize: lane-dense partials write -------
        @pl.when(i == inner_steps - 1)
        def _fin():
            ce_s = jnp.sum(acc_ce[...])     # sum_i (logsumexp_i - picked_i)
            di_s = jnp.sum(acc_dice[...])   # sum_i cls_i * (1 - dice_i)
            cl_s = jnp.sum(acc_cls[...])    # sum_i cls_i
            lane = jax.lax.broadcasted_iota(jnp.int32, (1, 1, 128), 2)
            partials_ref[...] = jnp.where(
                lane == 0, ce_s,
                jnp.where(lane == 1, di_s,
                          jnp.where(lane == 2, cl_s, 0.0)))

    return kernel


def _pick_tiling(n, f, c, stream_itemsize, logits_itemsize):
    """Generation-aware tiling: (block_n, n_outer, inner, real_tiles, vmem_limit)."""
    try:
        kind = jax.devices()[0].device_kind.lower()
    except Exception:  # defensive: fall back to the conservative budget
        kind = ""
    if "v7" in kind:
        # 64 MiB physical / 32 MiB scoped default, 3.2 TB/s HBM: large tiles
        # to amortize the fixed per-step cost, headroom left under the limit.
        budget, vmem_limit = 20 << 20, 44 << 20
    elif "v6" in kind:
        # 128 MiB physical / 32 MiB scoped default.
        budget, vmem_limit = 22 << 20, 56 << 20
    else:
        # v5e (16 MiB scoped default) / v4 / unknown: firmly HBM-bound, keep
        # the conservative tile and just raise the scoped limit a little.
        budget, vmem_limit = 10 << 20, 28 << 20

    itemsize = max(int(stream_itemsize), 1)
    per_row = 2 * 2 * f * itemsize        # patch + mask, double-buffered streams
    per_row += 4 * f * 4                  # headroom: prod/psum + f32 casts for reduces
    per_row += 2 * c * max(int(logits_itemsize), 1) + 2 * 4 + 3 * 4  # logits/tgt/acc

    bn = int(budget // per_row)
    bn = max(8, min(bn, 4096))
    bn -= bn % 8

    if bn >= n:
        # Whole batch in one tile: full-extent block dims are always legal.
        vmem_limit = max(vmem_limit, n * per_row + (4 << 20))
        return n, 1, 1, 1, vmem_limit

    real_tiles = pl.cdiv(n, bn)
    n_outer = 2                            # split across the 2 TCs on v7x
    inner = pl.cdiv(real_tiles, n_outer)
    # Rebalance block_n so both outer chunks get (nearly) equal work; leftover
    # phantom tiles are clamped + masked inside the kernel.
    bn2 = -(-n // (n_outer * inner))
    bn2 += (-bn2) % 8
    bn = max(8, min(bn, bn2))
    real_tiles = pl.cdiv(n, bn)
    vmem_limit = max(vmem_limit, bn * per_row + (4 << 20))
    return bn, n_outer, inner, real_tiles, vmem_limit


def multitask_loss(predict_img, predict_patch, targets, mask, log_vars, *,
                   tiling=None):
    """Forward of MultiTaskLoss given the backbone outputs.

    Returns (loss, predict_img, predict_patch, log_vars). log_vars stays a
    device array (PyTorch returns .tolist(); convert at the call site) so the
    whole function is jit-able and host-sync free. `tiling=(block_n, n_outer,
    inner_steps)` optionally overrides the auto tiling (used for testing the
    multi-tile path at small shapes).
    """
    n, c = predict_img.shape

    # Flatten NCHW -> [N, F]; stream in the native (e.g. bf16) dtype and cast
    # on-chip — halves HBM traffic for bf16 backbone outputs.
    patch_flat = predict_patch.reshape(n, -1)
    mask_flat = mask.reshape(n, -1)

    # Zero-pad F to a multiple of 128 for lane-dense, unmasked vector loads.
    # Zeros are neutral for both sum(p*t) and sum(p+t). Only done when F is
    # misaligned (the pad is an extra HBM copy, so skip it otherwise).
    f_raw = patch_flat.shape[1]
    if f_raw % 128 != 0:
        pad = 128 - (f_raw % 128)
        patch_flat = jnp.pad(patch_flat, ((0, 0), (0, pad)))
        mask_flat = jnp.pad(mask_flat, ((0, 0), (0, pad)))
    f = patch_flat.shape[1]

    tgt = targets.astype(jnp.int32).reshape(n, 1)

    stream_itemsize = max(patch_flat.dtype.itemsize, mask_flat.dtype.itemsize)
    block_n, n_outer, inner_steps, real_tiles, vmem_limit = _pick_tiling(
        n, f, c, stream_itemsize, predict_img.dtype.itemsize)
    if tiling is not None:
        block_n, n_outer, inner_steps = tiling
        real_tiles = pl.cdiv(n, block_n)

    def _row_block(o, i):
        # Clamp phantom tiles (from the even 2-way outer split) to the last
        # real tile; their rows are fully masked out inside the kernel.
        return jnp.minimum(o * inner_steps + i, real_tiles - 1)

    bytes_accessed = (predict_img.size * predict_img.dtype.itemsize
                      + patch_flat.size * patch_flat.dtype.itemsize
                      + mask_flat.size * mask_flat.dtype.itemsize
                      + tgt.size * 4 + n_outer * 128 * 4)
    cost = pl.CostEstimate(
        flops=int(n * (6 * f + 10 * c)),
        transcendentals=int(n * (c + 2)),
        bytes_accessed=int(bytes_accessed),
    )

    partials = pl.pallas_call(
        _make_kernel(n, block_n, inner_steps),
        out_shape=jax.ShapeDtypeStruct((n_outer, 1, 128), jnp.float32),
        grid=(n_outer, inner_steps),
        in_specs=[
            pl.BlockSpec((block_n, c), lambda o, i: (_row_block(o, i), 0)),
            pl.BlockSpec((block_n, f), lambda o, i: (_row_block(o, i), 0)),
            pl.BlockSpec((block_n, f), lambda o, i: (_row_block(o, i), 0)),
            pl.BlockSpec((block_n, 1), lambda o, i: (_row_block(o, i), 0)),
        ],
        out_specs=pl.BlockSpec((1, 1, 128), lambda o, i: (o, 0, 0)),
        scratch_shapes=[pltpu.VMEM((block_n, 1), jnp.float32)] * 3,
        compiler_params=pltpu.CompilerParams(
            dimension_semantics=("parallel", "arbitrary"),
            vmem_limit_bytes=int(vmem_limit)),
        cost_estimate=cost,
    )(predict_img, patch_flat, mask_flat, tgt)

    # Tiny finalize in plain JAX: combine the per-outer-chunk (per-TC) partial
    # sums and apply the uncertainty weighting; fuses into the surrounding jit.
    ce_sum = jnp.sum(partials[:, 0, 0])
    dice_num = jnp.sum(partials[:, 0, 1])
    cls_sum = jnp.sum(partials[:, 0, 2])
    ce = ce_sum / jnp.float32(n)
    # NOTE: like the PyTorch reference, Dice_loss divides by sum(targets);
    # a batch whose targets are all class 0 yields NaN/inf (documented
    # precondition of the original module).
    dice_loss = dice_num / cls_sum
    lv = log_vars.astype(jnp.float32)
    loss = jnp.exp(-lv[0]) * ce + lv[0] + jnp.exp(-lv[1]) * dice_loss + lv[1]
    return loss, predict_img, predict_patch, log_vars


def _reference_loss(predict_img, predict_patch, targets, mask, log_vars):
    """Pure-JAX reference mirroring the PyTorch forward."""
    logits = predict_img.astype(jnp.float32)
    lse = jax.nn.logsumexp(logits, axis=-1)
    picked = jnp.take_along_axis(logits, targets[:, None].astype(jnp.int32),
                                 axis=-1)[:, 0]
    ce = jnp.mean(lse - picked)

    p = predict_patch.astype(jnp.float32)
    t = mask.astype(jnp.float32)
    top = jnp.sum(p * t, axis=(1, 2, 3)) + 1e-10
    down = jnp.sum(p, axis=(1, 2, 3)) + jnp.sum(t, axis=(1, 2, 3)) + 1e-10
    dice = 2.0 * top / down
    cls = targets.astype(jnp.float32)
    dl = jnp.sum(cls * (1.0 - dice)) / jnp.sum(cls)

    lv0, lv1 = log_vars[0], log_vars[1]
    return jnp.exp(-lv0) * ce + lv0 + jnp.exp(-lv1) * dl + lv1


if __name__ == "__main__":
    key = jax.random.PRNGKey(0)
    k1, k2, k3, k4, k5 = jax.random.split(key, 5)

    N, C = 2, 4            # batch, number of classes
    C1, H, W = 1, 16, 16   # predict_patch / mask spatial shape (NCHW)

    predict_img = jax.random.normal(k1, (N, C), dtype=jnp.float32)
    # Large operands in bf16 (native backbone output dtype): the kernel does
    # the elementwise math in bf16 and accumulates the reductions in f32, so
    # HBM traffic is halved vs shipping f32.
    predict_patch = jax.nn.sigmoid(
        jax.random.normal(k2, (N, C1, H, W), dtype=jnp.float32)
    ).astype(jnp.bfloat16)
    mask = (jax.random.uniform(k3, (N, C1, H, W)) > 0.5).astype(jnp.bfloat16)
    targets = jnp.array([1, 3], dtype=jnp.int32)   # class labels (nonzero sum)
    log_vars = jnp.zeros((2,), dtype=jnp.float32)  # nn.Parameter(zeros(task_num))

    loss_fn = jax.jit(multitask_loss)
    loss, p_img, p_patch, lv = loss_fn(predict_img, predict_patch, targets,
                                       mask, log_vars)
    loss = jax.block_until_ready(loss)
    ref = jax.block_until_ready(
        _reference_loss(predict_img, predict_patch, targets, mask, log_vars))
    # Tolerance covers the EUP approx reciprocal (~2^-12) and bf16 elementwise
    # rounding in the dice term.
    assert jnp.allclose(loss, ref, rtol=5e-3, atol=5e-3), (loss, ref)

    # Second check: force the multi-tile / two-outer-chunk path (the v7x 2-TC
    # split) including a clamped "phantom" tile, still at small shapes.
    N2 = 20
    predict_img2 = jax.random.normal(k4, (N2, C), dtype=jnp.float32)
    predict_patch2 = jax.nn.sigmoid(
        jax.random.normal(k5, (N2, C1, H, W), dtype=jnp.float32)
    ).astype(jnp.bfloat16)
    mask2 = (jax.random.uniform(k3, (N2, C1, H, W)) > 0.5).astype(jnp.bfloat16)
    targets2 = jnp.arange(N2, dtype=jnp.int32) % C        # sum(targets2) > 0
    loss2, _, _, _ = multitask_loss(predict_img2, predict_patch2, targets2,
                                    mask2, log_vars, tiling=(8, 2, 2))
    loss2 = jax.block_until_ready(loss2)
    ref2 = jax.block_until_ready(
        _reference_loss(predict_img2, predict_patch2, targets2, mask2,
                        log_vars))
    assert jnp.allclose(loss2, ref2, rtol=5e-3, atol=5e-3), (loss2, ref2)

    print("KERNEL_OK")
</pallas_src>

<mosaic_0001>
module attributes {stable_mosaic.version = 11 : i64} {
  func.func @kernel(%arg0: i32, %arg1: i32, %arg2: memref<2x4xf32, #tpu.memory_space<vmem>>, %arg3: memref<2x256xbf16, #tpu.memory_space<vmem>>, %arg4: memref<2x256xbf16, #tpu.memory_space<vmem>>, %arg5: memref<2x1xi32, #tpu.memory_space<vmem>>, %arg6: memref<1x1x128xf32, #tpu.memory_space<vmem>>, %arg7: memref<2x1xf32, #tpu.memory_space<vmem>>, %arg8: memref<2x1xf32, #tpu.memory_space<vmem>>, %arg9: memref<2x1xf32, #tpu.memory_space<vmem>>) attributes {dimension_semantics = [#tpu.dimension_semantics<parallel>, #tpu.dimension_semantics<arbitrary>], iteration_bounds = array<i64: 1, 1>, scalar_prefetch = 0 : i64, scratch_operands = 3 : i64, tpu.core_type = #tpu.core_type<tc>, window_params = [{transform_indices = @transform_0, window_bounds = array<i64: 2, 4>}, {transform_indices = @transform_1, window_bounds = array<i64: 2, 256>}, {transform_indices = @transform_2, window_bounds = array<i64: 2, 256>}, {transform_indices = @transform_3, window_bounds = array<i64: 2, 1>}, {transform_indices = @transform_4, window_bounds = array<i64: 1, 1, 128>}]} {
    %c0_i32 = arith.constant 0 : i32
    %0 = arith.cmpi eq, %arg1, %c0_i32 : i32
    %1 = arith.extui %0 : i1 to i32
    %c0_i32_0 = arith.constant 0 : i32
    %2 = arith.cmpi ne, %1, %c0_i32_0 : i32
    scf.if %2 {
      %cst_35 = arith.constant 0.000000e+00 : f32
      %70 = vector.broadcast %cst_35 : f32 to vector<2x1xf32>
      %c0_36 = arith.constant 0 : index
      %c0_37 = arith.constant 0 : index
      %71 = vector.load %arg7[%c0_36, %c0_37] : memref<2x1xf32, #tpu.memory_space<vmem>>, vector<2x1xf32>
      tpu.vector_store %arg7[%c0_36, %c0_37], %70 {strides = array<i32>} : memref<2x1xf32, #tpu.memory_space<vmem>>, vector<2x1xf32>,
      %cst_38 = arith.constant 0.000000e+00 : f32
      %72 = vector.broadcast %cst_38 : f32 to vector<2x1xf32>
      %c0_39 = arith.constant 0 : index
      %c0_40 = arith.constant 0 : index
      %73 = vector.load %arg8[%c0_39, %c0_40] : memref<2x1xf32, #tpu.memory_space<vmem>>, vector<2x1xf32>
      tpu.vector_store %arg8[%c0_39, %c0_40], %72 {strides = array<i32>} : memref<2x1xf32, #tpu.memory_space<vmem>>, vector<2x1xf32>,
      %cst_41 = arith.constant 0.000000e+00 : f32
      %74 = vector.broadcast %cst_41 : f32 to vector<2x1xf32>
      %c0_42 = arith.constant 0 : index
      %c0_43 = arith.constant 0 : index
      %75 = vector.load %arg9[%c0_42, %c0_43] : memref<2x1xf32, #tpu.memory_space<vmem>>, vector<2x1xf32>
      tpu.vector_store %arg9[%c0_42, %c0_43], %74 {strides = array<i32>} : memref<2x1xf32, #tpu.memory_space<vmem>>, vector<2x1xf32>,
    } else {
    }
    %c1_i32 = arith.constant 1 : i32
    %3 = arith.muli %arg0, %c1_i32 : i32
    %4 = arith.addi %3, %arg1 : i32
    %5 = tpu.iota {dimensions = array<i32: 0>} : vector<2x1xi32>
    %c2_i32 = arith.constant 2 : i32
    %6 = arith.muli %4, %c2_i32 : i32
    %7 = vector.broadcast %6 : i32 to vector<2x1xi32>
    %8 = arith.addi %5, %7 : vector<2x1xi32>
    %c2_i32_1 = arith.constant 2 : i32
    %9 = vector.broadcast %c2_i32_1 : i32 to vector<2x1xi32>
    %10 = arith.cmpi slt, %8, %9 : vector<2x1xi32>
    %c0 = arith.constant 0 : index
    %c0_2 = arith.constant 0 : index
    %11 = vector.load %arg2[%c0, %c0_2] : memref<2x4xf32, #tpu.memory_space<vmem>>, vector<2x4xf32>
    %c0_3 = arith.constant 0 : index
    %c0_4 = arith.constant 0 : index
    %12 = vector.load %arg5[%c0_3, %c0_4] : memref<2x1xi32, #tpu.memory_space<vmem>>, vector<2x1xi32>
    %cst = arith.constant dense<0xFF800000> : vector<2xf32>
    %13 = vector.multi_reduction <maximumf>, %11, %cst [1] : vector<2x4xf32> to vector<2xf32>
    %14 = vector.shape_cast %13 : vector<2xf32> to vector<2x1xf32>
    %15 = vector.broadcast %14 : vector<2x1xf32> to vector<2x4xf32>
    %16 = arith.subf %11, %15 : vector<2x4xf32>
    %17 = math.exp %16 : vector<2x4xf32>
    %cst_5 = arith.constant dense<0.000000e+00> : vector<2xf32>
    %18 = vector.multi_reduction <add>, %17, %cst_5 [1] : vector<2x4xf32> to vector<2xf32>
    %19 = vector.shape_cast %18 : vector<2xf32> to vector<2x1xf32>
    %20 = math.log %19 : vector<2x1xf32>
    %21 = arith.addf %14, %20 : vector<2x1xf32>
    %22 = tpu.iota {dimensions = array<i32: 1>} : vector<2x4xi32>
    %23 = vector.broadcast %12 : vector<2x1xi32> to vector<2x4xi32>
    %24 = arith.cmpi eq, %22, %23 : vector<2x4xi32>
    %cst_6 = arith.constant 0.000000e+00 : f32
    %25 = vector.broadcast %cst_6 : f32 to vector<2x4xf32>
    %26 = arith.select %24, %11, %25 : vector<2x4xi1>, vector<2x4xf32>
    %cst_7 = arith.constant dense<0.000000e+00> : vector<2xf32>
    %27 = vector.multi_reduction <add>, %26, %cst_7 [1] : vector<2x4xf32> to vector<2xf32>
    %28 = vector.shape_cast %27 : vector<2xf32> to vector<2x1xf32>
    %29 = arith.subf %21, %28 : vector<2x1xf32>
    %cst_8 = arith.constant 0.000000e+00 : f32
    %30 = vector.broadcast %cst_8 : f32 to vector<2x1xf32>
    %31 = arith.select %10, %29, %30 : vector<2x1xi1>, vector<2x1xf32>
    %c0_9 = arith.constant 0 : index
    %c0_10 = arith.constant 0 : index
    %32 = vector.load %arg3[%c0_9, %c0_10] : memref<2x256xbf16, #tpu.memory_space<vmem>>, vector<2x256xbf16>
    %c0_11 = arith.constant 0 : index
    %c0_12 = arith.constant 0 : index
    %33 = vector.load %arg4[%c0_11, %c0_12] : memref<2x256xbf16, #tpu.memory_space<vmem>>, vector<2x256xbf16>
    %34 = arith.mulf %32, %33 : vector<2x256xbf16>
    %35 = arith.extf %34 : vector<2x256xbf16> to vector<2x256xf32>
    %cst_13 = arith.constant dense<0.000000e+00> : vector<2xf32>
    %36 = vector.multi_reduction <add>, %35, %cst_13 [1] : vector<2x256xf32> to vector<2xf32>
    %37 = vector.shape_cast %36 : vector<2xf32> to vector<2x1xf32>
    %cst_14 = arith.constant 1.000000e-10 : f32
    %38 = vector.broadcast %cst_14 : f32 to vector<2x1xf32>
    %39 = arith.addf %37, %38 : vector<2x1xf32>
    %40 = arith.addf %32, %33 : vector<2x256xbf16>
    %41 = arith.extf %40 : vector<2x256xbf16> to vector<2x256xf32>
    %cst_15 = arith.constant dense<0.000000e+00> : vector<2xf32>
    %42 = vector.multi_reduction <add>, %41, %cst_15 [1] : vector<2x256xf32> to vector<2xf32>
    %43 = vector.shape_cast %42 : vector<2xf32> to vector<2x1xf32>
    %cst_16 = arith.constant 1.000000e-10 : f32
    %44 = vector.broadcast %cst_16 : f32 to vector<2x1xf32>
    %45 = arith.addf %43, %44 : vector<2x1xf32>
    %cst_17 = arith.constant 2.000000e+00 : f32
    %46 = vector.broadcast %cst_17 : f32 to vector<2x1xf32>
    %47 = arith.mulf %46, %39 : vector<2x1xf32>
    %48 = tpu.reciprocal %45 {approx = true} : vector<2x1xf32> -> vector<2x1xf32>
    %49 = arith.mulf %47, %48 : vector<2x1xf32>
    %50 = arith.sitofp %12 : vector<2x1xi32> to vector<2x1xf32>
    %cst_18 = arith.constant 0.000000e+00 : f32
    %51 = vector.broadcast %cst_18 : f32 to vector<2x1xf32>
    %52 = arith.select %10, %50, %51 : vector<2x1xi1>, vector<2x1xf32>
    %cst_19 = arith.constant 1.000000e+00 : f32
    %53 = vector.broadcast %cst_19 : f32 to vector<2x1xf32>
    %54 = arith.subf %53, %49 : vector<2x1xf32>
    %55 = arith.mulf %52, %54 : vector<2x1xf32>
    %cst_20 = arith.constant 0.000000e+00 : f32
    %56 = vector.broadcast %cst_20 : f32 to vector<2x1xf32>
    %57 = arith.select %10, %55, %56 : vector<2x1xi1>, vector<2x1xf32>
    %c0_21 = arith.constant 0 : index
    %c0_22 = arith.constant 0 : index
    %58 = vector.load %arg7[%c0_21, %c0_22] : memref<2x1xf32, #tpu.memory_space<vmem>>, vector<2x1xf32>
    %59 = arith.addf %58, %31 : vector<2x1xf32>
    %c0_23 = arith.constant 0 : index
    %c0_24 = arith.constant 0 : index
    %60 = vector.load %arg7[%c0_23, %c0_24] : memref<2x1xf32, #tpu.memory_space<vmem>>, vector<2x1xf32>
    tpu.vector_store %arg7[%c0_23, %c0_24], %59 {strides = array<i32>} : memref<2x1xf32, #tpu.memory_space<vmem>>, vector<2x1xf32>,
    %c0_25 = arith.constant 0 : index
    %c0_26 = arith.constant 0 : index
    %61 = vector.load %arg8[%c0_25, %c0_26] : memref<2x1xf32, #tpu.memory_space<vmem>>, vector<2x1xf32>
    %62 = arith.addf %61, %57 : vector<2x1xf32>
    %c0_27 = arith.constant 0 : index
    %c0_28 = arith.constant 0 : index
    %63 = vector.load %arg8[%c0_27, %c0_28] : memref<2x1xf32, #tpu.memory_space<vmem>>, vector<2x1xf32>
    tpu.vector_store %arg8[%c0_27, %c0_28], %62 {strides = array<i32>} : memref<2x1xf32, #tpu.memory_space<vmem>>, vector<2x1xf32>,
    %c0_29 = arith.constant 0 : index
    %c0_30 = arith.constant 0 : index
    %64 = vector.load %arg9[%c0_29, %c0_30] : memref<2x1xf32, #tpu.memory_space<vmem>>, vector<2x1xf32>
    %65 = arith.addf %64, %52 : vector<2x1xf32>
    %c0_31 = arith.constant 0 : index
    %c0_32 = arith.constant 0 : index
    %66 = vector.load %arg9[%c0_31, %c0_32] : memref<2x1xf32, #tpu.memory_space<vmem>>, vector<2x1xf32>
    tpu.vector_store %arg9[%c0_31, %c0_32], %65 {strides = array<i32>} : memref<2x1xf32, #tpu.memory_space<vmem>>, vector<2x1xf32>,
    %c0_i32_33 = arith.constant 0 : i32
    %67 = arith.cmpi eq, %arg1, %c0_i32_33 : i32
    %68 = arith.extui %67 : i1 to i32
    %c0_i32_34 = arith.constant 0 : i32
    %69 = arith.cmpi ne, %68, %c0_i32_34 : i32
    scf.if %69 {
      %c0_35 = arith.constant 0 : index
      %c0_36 = arith.constant 0 : index
      %70 = vector.load %arg7[%c0_35, %c0_36] : memref<2x1xf32, #tpu.memory_space<vmem>>, vector<2x1xf32>
      %71 = vector.shape_cast %70 : vector<2x1xf32> to vector<1x2x1xf32>
      %cst_37 = arith.constant dense<0.000000e+00> : vector<1xf32>
      %72 = vector.multi_reduction <add>, %71, %cst_37 [1, 2] : vector<1x2x1xf32> to vector<1xf32>
      %73 = vector.shape_cast %72 : vector<1xf32> to vector<1x1x1xf32>
      %74 = vector.extract %73[0, 0, 0] : f32 from vector<1x1x1xf32>
      %c0_38 = arith.constant 0 : index
      %c0_39 = arith.constant 0 : index
      %75 = vector.load %arg8[%c0_38, %c0_39] : memref<2x1xf32, #tpu.memory_space<vmem>>, vector<2x1xf32>
      %76 = vector.shape_cast %75 : vector<2x1xf32> to vector<1x2x1xf32>
      %cst_40 = arith.constant dense<0.000000e+00> : vector<1xf32>
      %77 = vector.multi_reduction <add>, %76, %cst_40 [1, 2] : vector<1x2x1xf32> to vector<1xf32>
      %78 = vector.shape_cast %77 : vector<1xf32> to vector<1x1x1xf32>
      %79 = vector.extract %78[0, 0, 0] : f32 from vector<1x1x1xf32>
      %c0_41 = arith.constant 0 : index
      %c0_42 = arith.constant 0 : index
      %80 = vector.load %arg9[%c0_41, %c0_42] : memref<2x1xf32, #tpu.memory_space<vmem>>, vector<2x1xf32>
      %81 = vector.shape_cast %80 : vector<2x1xf32> to vector<1x2x1xf32>
      %cst_43 = arith.constant dense<0.000000e+00> : vector<1xf32>
      %82 = vector.multi_reduction <add>, %81, %cst_43 [1, 2] : vector<1x2x1xf32> to vector<1xf32>
      %83 = vector.shape_cast %82 : vector<1xf32> to vector<1x1x1xf32>
      %84 = vector.extract %83[0, 0, 0] : f32 from vector<1x1x1xf32>
      %85 = tpu.iota {dimensions = array<i32: 2>} : vector<1x1x128xi32>
      %c0_i32_44 = arith.constant 0 : i32
      %86 = vector.broadcast %c0_i32_44 : i32 to vector<1x1x128xi32>
      %87 = arith.cmpi eq, %85, %86 : vector<1x1x128xi32>
      %c1_i32_45 = arith.constant 1 : i32
      %88 = vector.broadcast %c1_i32_45 : i32 to vector<1x1x128xi32>
      %89 = arith.cmpi eq, %85, %88 : vector<1x1x128xi32>
      %c2_i32_46 = arith.constant 2 : i32
      %90 = vector.broadcast %c2_i32_46 : i32 to vector<1x1x128xi32>
      %91 = arith.cmpi eq, %85, %90 : vector<1x1x128xi32>
      %cst_47 = arith.constant 0.000000e+00 : f32
      %92 = vector.broadcast %84 : f32 to vector<1x1x128xf32>
      %93 = vector.broadcast %cst_47 : f32 to vector<1x1x128xf32>
      %94 = arith.select %91, %92, %93 : vector<1x1x128xi1>, vector<1x1x128xf32>
      %95 = vector.broadcast %79 : f32 to vector<1x1x128xf32>
      %96 = arith.select %89, %95, %94 : vector<1x1x128xi1>, vector<1x1x128xf32>
      %97 = vector.broadcast %74 : f32 to vector<1x1x128xf32>
      %98 = arith.select %87, %97, %96 : vector<1x1x128xi1>, vector<1x1x128xf32>
      %c0_48 = arith.constant 0 : index
      %c0_49 = arith.constant 0 : index
      %c0_50 = arith.constant 0 : index
      %99 = vector.load %arg6[%c0_48, %c0_49, %c0_50] : memref<1x1x128xf32, #tpu.memory_space<vmem>>, vector<1x1x128xf32>
      tpu.vector_store %arg6[%c0_48, %c0_49, %c0_50], %98 {strides = array<i32>} : memref<1x1x128xf32, #tpu.memory_space<vmem>>, vector<1x1x128xf32>,
    } else {
    }
    return
  }
  func.func @transform_0(%arg0: i32, %arg1: i32) -> (i32, i32) {
    %c1_i32 = arith.constant 1 : i32
    %0 = arith.muli %arg0, %c1_i32 : i32
    %1 = arith.addi %0, %arg1 : i32
    %c0_i32 = arith.constant 0 : i32
    %2 = arith.minsi %1, %c0_i32 : i32
    %c0_i32_0 = arith.constant 0 : i32
    %c0_i32_1 = arith.constant 0 : i32
    return %2, %c0_i32_0 : i32, i32
  }
  func.func @transform_1(%arg0: i32, %arg1: i32) -> (i32, i32) {
    %c1_i32 = arith.constant 1 : i32
    %0 = arith.muli %arg0, %c1_i32 : i32
    %1 = arith.addi %0, %arg1 : i32
    %c0_i32 = arith.constant 0 : i32
    %2 = arith.minsi %1, %c0_i32 : i32
    %c0_i32_0 = arith.constant 0 : i32
    %c0_i32_1 = arith.constant 0 : i32
    return %2, %c0_i32_0 : i32, i32
  }
  func.func @transform_2(%arg0: i32, %arg1: i32) -> (i32, i32) {
    %c1_i32 = arith.constant 1 : i32
    %0 = arith.muli %arg0, %c1_i32 : i32
    %1 = arith.addi %0, %arg1 : i32
    %c0_i32 = arith.constant 0 : i32
    %2 = arith.minsi %1, %c0_i32 : i32
    %c0_i32_0 = arith.constant 0 : i32
    %c0_i32_1 = arith.constant 0 : i32
    return %2, %c0_i32_0 : i32, i32
  }
  func.func @transform_3(%arg0: i32, %arg1: i32) -> (i32, i32) {
    %c1_i32 = arith.constant 1 : i32
    %0 = arith.muli %arg0, %c1_i32 : i32
    %1 = arith.addi %0, %arg1 : i32
    %c0_i32 = arith.constant 0 : i32
    %2 = arith.minsi %1, %c0_i32 : i32
    %c0_i32_0 = arith.constant 0 : i32
    %c0_i32_1 = arith.constant 0 : i32
    return %2, %c0_i32_0 : i32, i32
  }
  func.func @transform_4(%arg0: i32, %arg1: i32) -> (i32, i32, i32) {
    %c0_i32 = arith.constant 0 : i32
    %c0_i32_0 = arith.constant 0 : i32
    %c0_i32_1 = arith.constant 0 : i32
    return %arg0, %c0_i32, %c0_i32_0 : i32, i32, i32
  }
}

</mosaic_0001>

<llo_original>
// kernel: multitask_loss.1
$region0: #{multitask_loss.1}
  #allocation0 [shape = 'u32[]', space=smem, size = 0x4, offset = 0x4, fixed_abs, tag = 'smem constant byte address 0x4 - core index']
  #allocation1 [shape = 'u32[72,128]{1,0:T(1,128)}', space=vmem, size = 0x9000, scoped, tag = 'internal scratch']
  #allocation2 [shape = 'f32[2,1]{1,0:T(2,128)}', space=vmem, size = 0x400, scoped, tag = 'scratch operand']
  #allocation3 [shape = 'f32[2,1]{1,0:T(2,128)}', space=vmem, size = 0x400, scoped, tag = 'scratch operand']
  #allocation4 [shape = 'f32[2,1]{1,0:T(2,128)}', space=vmem, size = 0x400, scoped, tag = 'scratch operand']
  %s0 = inlined_call_operand.vmem [shape: f32[2,4], index: 0, kind: input, shape index: {}]
  %s1 = inlined_call_operand.vmem [shape: bf16[2,256], index: 1, kind: input, shape index: {}]
  %s2 = inlined_call_operand.vmem [shape: bf16[2,256], index: 2, kind: input, shape index: {}]
  %s3 = inlined_call_operand.vmem [shape: s32[2,1], index: 3, kind: input, shape index: {}]
  %s4 = inlined_call_operand.vmem [shape: f32[1,1,128], index: 4, kind: output, shape index: {}]
  %s5 = sld [smem:[#allocation0]]
  $region34: #{multitask_loss.1} parent=0
    _
  %s7 = ssub.s32 1, %s5
  %s8 = scalar_select 0, %s7, %s5
  // Predicated region
  $region2: #{multitask_loss.1} parent=0 // pred_check
    _
  $region3: #{multitask_loss.1} parent=0 // pred_check_branch
    %10 = sbr.rel (0) target = $region5
  $region4: #{multitask_loss.1} parent=0 // pred_region
    %s11 = sadd.s32 0, 0
    %p12 = scmp.lt.s32.totalorder %s11, 0
    %s13 = scalar_select %p12, %s11, 0
    %p14 = scmp.lt.s32.totalorder %s13, 0
    %s15 = scalar_select %p14, %s13, 0
    %s16 = smul.addr %s15, 2
    %s17 = scalar_lea.vmem %s0, %s16
    %s18 = sadd.s32 0, 0
    %p19 = scmp.lt.s32.totalorder %s18, 0
    %s20 = scalar_select %p19, %s18, 0
  $region5: #{multitask_loss.1} parent=0 // pred_fallthru
    _
  // Predicated region
  $region6: #{multitask_loss.1} parent=0 // pred_check
    _
  $region7: #{multitask_loss.1} parent=0 // pred_check_branch
    %22 = sbr.rel (0) target = $region9
  $region8: #{multitask_loss.1} parent=0 // pred_region
    %s23 = sadd.s32 0, 0
    %p24 = scmp.lt.s32.totalorder %s23, 0
    %s25 = scalar_select %p24, %s23, 0
    %p26 = scmp.lt.s32.totalorder %s25, 0
    %s27 = scalar_select %p26, %s25, 0
    %s28 = smul.addr %s27, 2
    %s29 = scalar_lea.vmem %s1, %s28
    %s30 = sadd.s32 0, 0
    %p31 = scmp.lt.s32.totalorder %s30, 0
    %s32 = scalar_select %p31, %s30, 0
  $region9: #{multitask_loss.1} parent=0 // pred_fallthru
    _
  // Predicated region
  $region10: #{multitask_loss.1} parent=0 // pred_check
    _
  $region11: #{multitask_loss.1} parent=0 // pred_check_branch
    %34 = sbr.rel (0) target = $region13
  $region12: #{multitask_loss.1} parent=0 // pred_region
    %s35 = sadd.s32 0, 0
    %p36 = scmp.lt.s32.totalorder %s35, 0
    %s37 = scalar_select %p36, %s35, 0
    %p38 = scmp.lt.s32.totalorder %s37, 0
    %s39 = scalar_select %p38, %s37, 0
    %s40 = smul.addr %s39, 2
    %s41 = scalar_lea.vmem %s2, %s40
    %s42 = sadd.s32 0, 0
    %p43 = scmp.lt.s32.totalorder %s42, 0
    %s44 = scalar_select %p43, %s42, 0
  $region13: #{multitask_loss.1} parent=0 // pred_fallthru
    _
  // Predicated region
  $region14: #{multitask_loss.1} parent=0 // pred_check
    _
  $region15: #{multitask_loss.1} parent=0 // pred_check_branch
    %46 = sbr.rel (0) target = $region17
  $region16: #{multitask_loss.1} parent=0 // pred_region
    %s47 = sadd.s32 0, 0
    %p48 = scmp.lt.s32.totalorder %s47, 0
    %s49 = scalar_select %p48, %s47, 0
    %p50 = scmp.lt.s32.totalorder %s49, 0
    %s51 = scalar_select %p50, %s49, 0
    %s52 = smul.addr %s51, 2
    %s53 = scalar_lea.vmem %s3, %s52
    %s54 = sadd.s32 0, 0
    %p55 = scmp.lt.s32.totalorder %s54, 0
    %s56 = scalar_select %p55, %s54, 0
  $region17: #{multitask_loss.1} parent=0 // pred_fallthru
    _
  %s57 = sadd.s32 0, 0
  %p58 = scmp.lt.s32.totalorder %s57, 0
  %s59 = scalar_select %p58, %s57, 0
  %p60 = scmp.lt.s32.totalorder %s59, 0
  %s61 = scalar_select %p60, %s59, 0
  %s62 = smul.addr %s61, 2
  %s63 = scalar_lea.vmem %s0, %s62
  %s64 = sadd.s32 0, 0
  %p65 = scmp.lt.s32.totalorder %s64, 0
  %s66 = scalar_select %p65, %s64, 0
  %p67 = scmp.lt.s32.totalorder %s66, 0
  %s68 = scalar_select %p67, %s66, 0
  %s69 = smul.addr %s68, 2
  %s70 = scalar_lea.vmem %s1, %s69
  %s71 = sadd.s32 0, 0
  %p72 = scmp.lt.s32.totalorder %s71, 0
  %s73 = scalar_select %p72, %s71, 0
  %p74 = scmp.lt.s32.totalorder %s73, 0
  %s75 = scalar_select %p74, %s73, 0
  %s76 = smul.addr %s75, 2
  %s77 = scalar_lea.vmem %s2, %s76
  %s78 = sadd.s32 0, 0
  %p79 = scmp.lt.s32.totalorder %s78, 0
  %s80 = scalar_select %p79, %s78, 0
  %p81 = scmp.lt.s32.totalorder %s80, 0
  %s82 = scalar_select %p81, %s80, 0
  %s83 = smul.addr %s82, 2
  %s84 = scalar_lea.vmem %s3, %s83
  %s85 = sadd.s32 0, 0
  %p86 = scmp.lt.s32.totalorder %s85, 0
  %s87 = scalar_select %p86, %s85, 0
  %p88 = scmp.lt.s32.totalorder %s87, 0
  %s89 = scalar_select %p88, %s87, 0
  %s90 = smul.addr %s89, 2
  %s91 = scalar_lea.vmem %s0, %s90
  %s92 = sadd.s32 0, 0
  %p93 = scmp.lt.s32.totalorder %s92, 0
  %s94 = scalar_select %p93, %s92, 0
  %s95 = sadd.s32 0, 0
  %p96 = scmp.lt.s32.totalorder %s95, 0
  %s97 = scalar_select %p96, %s95, 0
  %p98 = scmp.lt.s32.totalorder %s97, 0
  %s99 = scalar_select %p98, %s97, 0
  %s100 = smul.addr %s99, 2
  %s101 = scalar_lea.vmem %s1, %s100
  %s102 = sadd.s32 0, 0
  %p103 = scmp.lt.s32.totalorder %s102, 0
  %s104 = scalar_select %p103, %s102, 0
  %s105 = sadd.s32 0, 0
  %p106 = scmp.lt.s32.totalorder %s105, 0
  %s107 = scalar_select %p106, %s105, 0
  %p108 = scmp.lt.s32.totalorder %s107, 0
  %s109 = scalar_select %p108, %s107, 0
  %s110 = smul.addr %s109, 2
  %s111 = scalar_lea.vmem %s2, %s110
  %s112 = sadd.s32 0, 0
  %p113 = scmp.lt.s32.totalorder %s112, 0
  %s114 = scalar_select %p113, %s112, 0
  %s115 = sadd.s32 0, 0
  %p116 = scmp.lt.s32.totalorder %s115, 0
  %s117 = scalar_select %p116, %s115, 0
  %p118 = scmp.lt.s32.totalorder %s117, 0
  %s119 = scalar_select %p118, %s117, 0
  %s120 = smul.addr %s119, 2
  %s121 = scalar_lea.vmem %s3, %s120
  %s122 = sadd.s32 0, 0
  %p123 = scmp.lt.s32.totalorder %s122, 0
  %s124 = scalar_select %p123, %s122, 0
  %p125 = scmp.eq.s32.totalorder 0, 0
  // Predicated region
  $region18: #{multitask_loss.1} parent=0 // pred_check
    %p126 = pneg %p125
  $region19: #{multitask_loss.1} parent=0 // pred_check_branch
    %128 = sbr.rel (%p126) target = $region21
  $region20: #{multitask_loss.1} parent=0 // pred_region
    %vm129 = vcmask 1024
    %130 = vst.msk [vmem:[#allocation2] sm:$0x3] %vm129, 0.0
    %131 = vst.msk [vmem:[#allocation3] sm:$0x3] %vm129, 0.0
    %132 = vst.msk [vmem:[#allocation4] sm:$0x3] %vm129, 0.0
  $region21: #{multitask_loss.1} parent=0 // pred_fallthru
    _
  %s133 = sadd.s32 0, 0
  %v134 = vlaneseq
  %v135 = vshrl.u32 %v134, 7
  %s136 = smul.u32 %s133, 2
  %v137 = vstv %s136
  %v138 = vadd.s32 %v135, %v137
  %vm139 = vcmp.lt.s32.totalorder %v138, 2
  %v140 = vld [vmem:[%s91] sm:$0x3]
  %v141 = vld [vmem:[%s121] sm:$0x3]
  %vm142 = vcmask 25600
  %v143 = vsel %vm142, %v140, -inf
  %144 = vmax.xlane.f32.xlu0 %v143
  %v145 = vpop.xlane.xlu0 %144
  %v146 = vsub.f32 %v140, %v145
  %v147 = vmul.f32 %v146, 1.442695
  %v148 = vpow.pop %v147
  %v149 = vsel %vm142, %v148, 0.0
  %150 = vadd.xlane.f32.xlu0 %v149
  %v151 = vpop.xlane.xlu0 %150
  %v152 = vlog2.pop %v151
  %v153 = vmul.f32 %v152, 0.6931472
  %v154 = vadd.f32 %v145, %v153
  %v155 = vlaneseq
  %v156 = vand.u32 %v155, 127
  %157 = vset.pattern.permute.xlu0 0
  %158 = vperm.xlu0 %157, %v141
  %v159 = vpop.permute.xlu0 %158
  %vm160 = vcmp.eq.s32.totalorder %v156, %v159
  %v161 = vsel %vm160, %v140, 0.0
  %v162 = vsel %vm142, %v161, 0.0
  %163 = vadd.xlane.f32.xlu0 %v162
  %v164 = vpop.xlane.xlu0 %163
  %v165 = vsub.f32 %v154, %v164
  %v166 = vsel %vm139, %v165, 0.0
  %v167 = vld [vmem:[%s101] sm:$0x3]
  %v168 = vld [vmem:[%s111] sm:$0x3]
  %v169 = vunpack.c.l.bf16 %v167
  %v170 = vunpack.c.l.bf16 %v168
  %v171 = vmul.f32 %v169, %v170
  %173 = vst [vmem:[#allocation1] ss:$4 sm:$0xff] %v171
  %v174 = vld.sshfl [vmem:[#allocation1] sm:$0xff pattern:$0x73625140]
  %v175 = vld.sshfl [vmem:[#allocation1 + $0x8] sm:$0xff pattern:$0x73625140]
  %v178 = vpack.c.bf16 %v174, %v174
  %v179 = vpack.c.bf16 %v175, %v175
  %v180 = vunpack.c.l.bf16 %v178
  %v181 = vunpack.c.l.bf16 %v179
  %vm182 = vcmask 1041408
  %v183 = vsel %vm182, %v180, 0.0
  %v184 = vsel %vm182, %v181, 0.0
  %v185 = vadd.f32 %v183, %v184
  %186 = vadd.xlane.f32.xlu0 %v185
  %v187 = vpop.xlane.xlu0 %186
  %v188 = vadd.f32 %v187, 1e-10
  %v189 = vadd.f32 %v169, %v170
  %191 = vst [vmem:[#allocation1] ss:$4 sm:$0xff] %v189
  %v192 = vld.sshfl [vmem:[#allocation1] sm:$0xff pattern:$0x73625140]
  %v193 = vld.sshfl [vmem:[#allocation1 + $0x8] sm:$0xff pattern:$0x73625140]
  %v196 = vpack.c.bf16 %v192, %v192
  %v197 = vpack.c.bf16 %v193, %v193
  %v198 = vunpack.c.l.bf16 %v196
  %v199 = vunpack.c.l.bf16 %v197
  %v200 = vsel %vm182, %v198, 0.0
  %v201 = vsel %vm182, %v199, 0.0
  %v202 = vadd.f32 %v200, %v201
  %203 = vadd.xlane.f32.xlu0 %v202
  %v204 = vpop.xlane.xlu0 %203
  %v205 = vadd.f32 %v204, 1e-10
  %v206 = vmul.f32 %v188, 2.0
  %v207 = vrcp.pop %v205
  %v208 = vmul.f32 %v206, %v207
  %v209 = vcvt.s32.f32 %v141
  %v210 = vsel %vm139, %v209, 0.0
  %v211 = vsub.f32 1.0, %v208
  %v212 = vmul.f32 %v210, %v211
  %v213 = vsel %vm139, %v212, 0.0
  %v214 = vld [vmem:[#allocation2] sm:$0x3]
  %v215 = vadd.f32 %v214, %v166
  %vm216 = vcmask 1024
  %217 = vst.msk [vmem:[#allocation2] sm:$0x3] %vm216, %v215
  %v218 = vld [vmem:[#allocation3] sm:$0x3]
  %v219 = vadd.f32 %v218, %v213
  %220 = vst.msk [vmem:[#allocation3] sm:$0x3] %vm216, %v219
  %v221 = vld [vmem:[#allocation4] sm:$0x3]
  %v222 = vadd.f32 %v221, %v210
  %223 = vst.msk [vmem:[#allocation4] sm:$0x3] %vm216, %v222
  // Predicated region
  $region22: #{multitask_loss.1} parent=0 // pred_check
    %p224 = pneg %p125
  $region23: #{multitask_loss.1} parent=0 // pred_check_branch
    %226 = sbr.rel (%p224) target = $region25
  $region24: #{multitask_loss.1} parent=0 // pred_region
    %v227 = vld [vmem:[#allocation2] sm:$0x3]
    %v228 = vsel %vm216, %v227, 0.0
    %229 = vadd.xlane.f32.xlu0 %v228
    %v230 = vpop.xlane.xlu0 %229
    %v231 = vrot.slane %v230, 4
    %v232 = vadd.f32 %v230, %v231
    %v233 = vrot.slane %v232, 2
    %v234 = vadd.f32 %v232, %v233
    %v235 = vrot.slane %v234, 1
    %v236 = vadd.f32 %v234, %v235
    %s237 = vtos %v236
    %v238 = vld [vmem:[#allocation3] sm:$0x3]
    %v239 = vsel %vm216, %v238, 0.0
    %240 = vadd.xlane.f32.xlu0 %v239
    %v241 = vpop.xlane.xlu0 %240
    %v242 = vrot.slane %v241, 4
    %v243 = vadd.f32 %v241, %v242
    %v244 = vrot.slane %v243, 2
    %v245 = vadd.f32 %v243, %v244
    %v246 = vrot.slane %v245, 1
    %v247 = vadd.f32 %v245, %v246
    %s248 = vtos %v247
    %v249 = vld [vmem:[#allocation4] sm:$0x3]
    %v250 = vsel %vm216, %v249, 0.0
    %251 = vadd.xlane.f32.xlu0 %v250
    %v252 = vpop.xlane.xlu0 %251
    %v253 = vrot.slane %v252, 4
    %v254 = vadd.f32 %v252, %v253
    %v255 = vrot.slane %v254, 2
    %v256 = vadd.f32 %v254, %v255
    %v257 = vrot.slane %v256, 1
    %v258 = vadd.f32 %v256, %v257
    %s259 = vtos %v258
    %vm260 = vcmp.eq.s32.totalorder %v156, 0
    %vm261 = vcmp.eq.s32.totalorder %v156, 1
    %vm262 = vcmp.eq.s32.totalorder %v156, 2
    %v263 = vstv %s259
    %v264 = vsel %vm262, %v263, 0.0
    %v265 = vstv %s248
    %v266 = vsel %vm261, %v265, %v264
    %v267 = vstv %s237
    %v268 = vsel %vm260, %v267, %v266
    %269 = vst [vmem:[%s4] sm:$0x1] %v268
  $region25: #{multitask_loss.1} parent=0 // pred_fallthru
    _
  // Predicated region
  $region26: #{multitask_loss.1} parent=0 // pred_check
    _
  $region27: #{multitask_loss.1} parent=0 // pred_check_branch
    %271 = sbr.rel (0) target = $region29
  $region28: #{multitask_loss.1} parent=0 // pred_region
    _
  $region29: #{multitask_loss.1} parent=0 // pred_fallthru
    _
  // Predicated region
  $region30: #{multitask_loss.1} parent=0 // pred_check
    _
  $region31: #{multitask_loss.1} parent=0 // pred_check_branch
    %273 = sbr.rel (0) target = $region33
  $region32: #{multitask_loss.1} parent=0 // pred_region
    _
  $region33: #{multitask_loss.1} parent=0 // pred_fallthru
    _

</llo_original>
